<compile_context>
chip_gen: v7x
topology: tpu7x:2x2x1
jax: 0.10.0
libtpu: 0.0.40
codegen_flags: <defaults>
</compile_context>

<pallas_src>
import jax
import jax.numpy as jnp
from jax.experimental import pallas as pl
from jax.experimental.pallas import tpu as pltpu


def _round_up(n: int, m: int) -> int:
    return (n + m - 1) // m * m


def reward_net_kernel(xa_ref, w1_ref, b1_ref, w2_ref, b2_ref,
                      w3_ref, b3_ref, w4_ref, b4_ref, o_ref):
    # Transposed layout: activations are (features, tb); weights are (out, in).
    # fc1 (the obs/act concat is already fused into xa): h = relu(W1 @ xa + b1)
    h = jnp.dot(w1_ref[...], xa_ref[...], preferred_element_type=jnp.float32)
    h = jnp.maximum(h + b1_ref[...], 0.0)          # f32 bias/ReLU (v5e-safe)
    # fc2 + relu
    h = jnp.dot(w2_ref[...], h.astype(w2_ref.dtype),
                preferred_element_type=jnp.float32)
    h = jnp.maximum(h + b2_ref[...], 0.0)
    # fc3 + relu
    h = jnp.dot(w3_ref[...], h.astype(w3_ref.dtype),
                preferred_element_type=jnp.float32)
    h = jnp.maximum(h + b3_ref[...], 0.0)
    # fc4 (no activation); b4 is a scalar read from SMEM.
    out = jnp.dot(w4_ref[...], h.astype(w4_ref.dtype),
                  preferred_element_type=jnp.float32)
    o_ref[...] = (out + b4_ref[0, 0]).astype(o_ref.dtype)   # (1, tb) lane-dense store


def reward_net_forward(x, a, params, *, block_b=1024, use_bf16=True):
    """x: (B, obs_dim) f32, a: (B, act_dim) f32 -> (B, 1) f32."""
    w1, b1, w2, b2, w3, b3, w4, b4 = params
    B, obs_dim = x.shape
    act_dim = a.shape[1]
    in_dim = obs_dim + act_dim
    hidden = w1.shape[1]

    io_dtype = jnp.bfloat16 if use_bf16 else jnp.float32

    # Transposed, concat-fused input: (obs+act, B) with the batch on the lane axis.
    # (Row order matches concatenate([x, a], axis=1), so W1 stays unsplit.)
    xaT = jnp.concatenate([x.astype(io_dtype), a.astype(io_dtype)], axis=1).T

    # Pre-transposed weights: they become the small LHS of every matmul.
    w1T = w1.T.astype(io_dtype)                    # (hidden, in_dim)
    w2T = w2.T.astype(io_dtype)                    # (hidden, hidden)
    w3T = w3.T.astype(io_dtype)                    # (hidden, hidden)
    w4T = w4.T.astype(io_dtype)                    # (1, hidden)
    b1c = b1.reshape(hidden, 1)                    # column biases broadcast over lanes
    b2c = b2.reshape(hidden, 1)
    b3c = b3.reshape(hidden, 1)
    b4s = b4.reshape(1, 1).astype(jnp.float32)     # scalar bias -> SMEM

    # Batch tile: lane-aligned (multiple of 128); cap it so large batches produce
    # >= 2 grid steps (lets ("parallel",) shard across v7x's two TensorCores).
    tb = max(128, min(_round_up(block_b, 128), _round_up(pl.cdiv(B, 2), 128)))
    grid = (pl.cdiv(B, tb),)                       # no host-side padding of the batch

    def resident(shape):
        # Same block every grid step -> stays VMEM-resident across the whole grid.
        return pl.BlockSpec(shape, lambda i: (0, 0))

    itemsize = jnp.dtype(io_dtype).itemsize
    cost = pl.CostEstimate(
        flops=2 * B * (in_dim * hidden + 2 * hidden * hidden + hidden),
        transcendentals=0,
        bytes_accessed=int(B * in_dim * itemsize + B * 4
                           + (in_dim * hidden + 2 * hidden * hidden + hidden) * itemsize
                           + 3 * hidden * 4 + 4),
    )

    out = pl.pallas_call(
        reward_net_kernel,
        out_shape=jax.ShapeDtypeStruct((1, B), jnp.float32),
        grid=grid,
        in_specs=[
            pl.BlockSpec((in_dim, tb), lambda i: (0, i)),        # xa^T tile (pipelined)
            resident((hidden, in_dim)),                          # W1^T
            resident((hidden, 1)),                               # b1
            resident((hidden, hidden)),                          # W2^T
            resident((hidden, 1)),                               # b2
            resident((hidden, hidden)),                          # W3^T
            resident((hidden, 1)),                               # b3
            resident((1, hidden)),                               # W4^T
            pl.BlockSpec(memory_space=pltpu.MemorySpace.SMEM),   # b4 scalar (SMEM)
        ],
        out_specs=pl.BlockSpec((1, tb), lambda i: (0, i)),       # lane-dense output
        compiler_params=pltpu.CompilerParams(
            dimension_semantics=("parallel",),
        ),
        cost_estimate=cost,
    )(xaT, w1T, b1c, w2T, b2c, w3T, b3c, w4T, b4s)
    return out.reshape(B, 1)


def init_params(key, obs_dim, act_dim, hidden_dim):
    """Deterministic synthetic init (PyTorch-Linear-like uniform bounds)."""
    in_dim = obs_dim + act_dim
    keys = jax.random.split(key, 8)

    def linear(kw, kb, fan_in, fan_out):
        bound = 1.0 / jnp.sqrt(float(fan_in))
        w = jax.random.uniform(kw, (fan_in, fan_out), jnp.float32, -bound, bound)
        b = jax.random.uniform(kb, (1, fan_out), jnp.float32, -bound, bound)
        return w, b

    w1, b1 = linear(keys[0], keys[1], in_dim, hidden_dim)
    w2, b2 = linear(keys[2], keys[3], hidden_dim, hidden_dim)
    w3, b3 = linear(keys[4], keys[5], hidden_dim, hidden_dim)
    w4, b4 = linear(keys[6], keys[7], hidden_dim, 1)
    return (w1, b1, w2, b2, w3, b3, w4, b4)


def _reference(x, a, params):
    w1, b1, w2, b2, w3, b3, w4, b4 = params
    h = jnp.concatenate([x, a], axis=1)
    h = jnp.maximum(h @ w1 + b1, 0.0)
    h = jnp.maximum(h @ w2 + b2, 0.0)
    h = jnp.maximum(h @ w3 + b3, 0.0)
    return h @ w4 + b4


if __name__ == "__main__":
    B, OBS_DIM, ACT_DIM, HIDDEN = 8, 16, 8, 32

    key = jax.random.PRNGKey(0)
    k_x, k_a, k_p, k_x2, k_a2 = jax.random.split(key, 5)

    x = jax.random.normal(k_x, (B, OBS_DIM), jnp.float32)
    a = jax.random.normal(k_a, (B, ACT_DIM), jnp.float32)
    params = init_params(k_p, OBS_DIM, ACT_DIM, HIDDEN)
    ref = _reference(x, a, params)

    # f32-operand path (moderate tolerance: kernel and XLA reference may use
    # different MXU f32 pass decompositions).
    out_f32 = reward_net_forward(x, a, params, use_bf16=False)
    jax.block_until_ready(out_f32)
    assert out_f32.shape == (B, 1)
    assert jnp.allclose(out_f32, ref, atol=2e-2, rtol=2e-2)

    # Default bf16-operand path (f32 accumulate) on the small batch.
    out_bf16 = reward_net_forward(x, a, params)
    jax.block_until_ready(out_bf16)
    assert out_bf16.shape == (B, 1)
    assert jnp.allclose(out_bf16, ref, atol=1e-1, rtol=1e-1)

    # Larger, non-tile-aligned batch: exercises the multi-step grid and the ragged
    # last tile (no host-side padding of the batch).
    B2 = 1000
    x2 = jax.random.normal(k_x2, (B2, OBS_DIM), jnp.float32)
    a2 = jax.random.normal(k_a2, (B2, ACT_DIM), jnp.float32)
    ref2 = _reference(x2, a2, params)

    out2_f32 = reward_net_forward(x2, a2, params, block_b=256, use_bf16=False)
    jax.block_until_ready(out2_f32)
    assert out2_f32.shape == (B2, 1)
    assert jnp.allclose(out2_f32, ref2, atol=2e-2, rtol=2e-2)

    out2_bf16 = reward_net_forward(x2, a2, params, block_b=256)
    jax.block_until_ready(out2_bf16)
    assert out2_bf16.shape == (B2, 1)
    assert bool(jnp.all(jnp.isfinite(out2_bf16)))
    assert jnp.allclose(out2_bf16, ref2, atol=1e-1, rtol=1e-1)

    print("KERNEL_OK")
</pallas_src>

<mosaic_0001>
module attributes {stable_mosaic.version = 11 : i64} {
  func.func @reward_net_kernel(%arg0: i32, %arg1: memref<24x128xf32, #tpu.memory_space<vmem>>, %arg2: memref<32x24xf32, #tpu.memory_space<vmem>>, %arg3: memref<32x1xf32, #tpu.memory_space<vmem>>, %arg4: memref<32x32xf32, #tpu.memory_space<vmem>>, %arg5: memref<32x1xf32, #tpu.memory_space<vmem>>, %arg6: memref<32x32xf32, #tpu.memory_space<vmem>>, %arg7: memref<32x1xf32, #tpu.memory_space<vmem>>, %arg8: memref<1x32xf32, #tpu.memory_space<vmem>>, %arg9: memref<1x1xf32, #tpu.memory_space<smem>>, %arg10: memref<1x128xf32, #tpu.memory_space<vmem>>) attributes {dimension_semantics = [#tpu.dimension_semantics<parallel>], iteration_bounds = array<i64: 1>, scalar_prefetch = 0 : i64, scratch_operands = 0 : i64, tpu.core_type = #tpu.core_type<tc>, window_params = [{transform_indices = @transform_0, window_bounds = array<i64: 24, 128>}, {pipeline_mode = #tpu.pipeline_mode<synchronous>, transform_indices = @transform_1, window_bounds = array<i64: 32, 24>}, {pipeline_mode = #tpu.pipeline_mode<synchronous>, transform_indices = @transform_2, window_bounds = array<i64: 32, 1>}, {pipeline_mode = #tpu.pipeline_mode<synchronous>, transform_indices = @transform_3, window_bounds = array<i64: 32, 32>}, {pipeline_mode = #tpu.pipeline_mode<synchronous>, transform_indices = @transform_4, window_bounds = array<i64: 32, 1>}, {pipeline_mode = #tpu.pipeline_mode<synchronous>, transform_indices = @transform_5, window_bounds = array<i64: 32, 32>}, {pipeline_mode = #tpu.pipeline_mode<synchronous>, transform_indices = @transform_6, window_bounds = array<i64: 32, 1>}, {pipeline_mode = #tpu.pipeline_mode<synchronous>, transform_indices = @transform_7, window_bounds = array<i64: 1, 32>}, {transform_indices = @transform_8, window_bounds = array<i64: 1, 1>}, {transform_indices = @transform_9, window_bounds = array<i64: 1, 128>}]} {
    %c0 = arith.constant 0 : index
    %c0_0 = arith.constant 0 : index
    %0 = vector.load %arg2[%c0, %c0_0] : memref<32x24xf32, #tpu.memory_space<vmem>>, vector<32x24xf32>
    %c0_1 = arith.constant 0 : index
    %c0_2 = arith.constant 0 : index
    %1 = vector.load %arg1[%c0_1, %c0_2] : memref<24x128xf32, #tpu.memory_space<vmem>>, vector<24x128xf32>
    %cst = arith.constant dense<0.000000e+00> : vector<32x128xf32>
    %2 = tpu.matmul %0, %1, %cst {dimension_numbers = #tpu.dot_dimension_numbers<[1], [0], [0], [1], [0, 0, 1, 1], [], []>} : vector<32x24xf32>, vector<24x128xf32>, vector<32x128xf32> -> vector<32x128xf32>
    %c0_3 = arith.constant 0 : index
    %c0_4 = arith.constant 0 : index
    %3 = vector.load %arg3[%c0_3, %c0_4] : memref<32x1xf32, #tpu.memory_space<vmem>>, vector<32x1xf32>
    %4 = vector.broadcast %3 : vector<32x1xf32> to vector<32x128xf32>
    %5 = arith.addf %2, %4 : vector<32x128xf32>
    %cst_5 = arith.constant 0.000000e+00 : f32
    %6 = vector.broadcast %cst_5 : f32 to vector<32x128xf32>
    %7 = arith.maximumf %5, %6 : vector<32x128xf32>
    %c0_6 = arith.constant 0 : index
    %c0_7 = arith.constant 0 : index
    %8 = vector.load %arg4[%c0_6, %c0_7] : memref<32x32xf32, #tpu.memory_space<vmem>>, vector<32x32xf32>
    %cst_8 = arith.constant dense<0.000000e+00> : vector<32x128xf32>
    %9 = tpu.matmul %8, %7, %cst_8 {dimension_numbers = #tpu.dot_dimension_numbers<[1], [0], [0], [1], [0, 0, 1, 1], [], []>} : vector<32x32xf32>, vector<32x128xf32>, vector<32x128xf32> -> vector<32x128xf32>
    %c0_9 = arith.constant 0 : index
    %c0_10 = arith.constant 0 : index
    %10 = vector.load %arg5[%c0_9, %c0_10] : memref<32x1xf32, #tpu.memory_space<vmem>>, vector<32x1xf32>
    %11 = vector.broadcast %10 : vector<32x1xf32> to vector<32x128xf32>
    %12 = arith.addf %9, %11 : vector<32x128xf32>
    %cst_11 = arith.constant 0.000000e+00 : f32
    %13 = vector.broadcast %cst_11 : f32 to vector<32x128xf32>
    %14 = arith.maximumf %12, %13 : vector<32x128xf32>
    %c0_12 = arith.constant 0 : index
    %c0_13 = arith.constant 0 : index
    %15 = vector.load %arg6[%c0_12, %c0_13] : memref<32x32xf32, #tpu.memory_space<vmem>>, vector<32x32xf32>
    %cst_14 = arith.constant dense<0.000000e+00> : vector<32x128xf32>
    %16 = tpu.matmul %15, %14, %cst_14 {dimension_numbers = #tpu.dot_dimension_numbers<[1], [0], [0], [1], [0, 0, 1, 1], [], []>} : vector<32x32xf32>, vector<32x128xf32>, vector<32x128xf32> -> vector<32x128xf32>
    %c0_15 = arith.constant 0 : index
    %c0_16 = arith.constant 0 : index
    %17 = vector.load %arg7[%c0_15, %c0_16] : memref<32x1xf32, #tpu.memory_space<vmem>>, vector<32x1xf32>
    %18 = vector.broadcast %17 : vector<32x1xf32> to vector<32x128xf32>
    %19 = arith.addf %16, %18 : vector<32x128xf32>
    %cst_17 = arith.constant 0.000000e+00 : f32
    %20 = vector.broadcast %cst_17 : f32 to vector<32x128xf32>
    %21 = arith.maximumf %19, %20 : vector<32x128xf32>
    %c0_18 = arith.constant 0 : index
    %c0_19 = arith.constant 0 : index
    %22 = vector.load %arg8[%c0_18, %c0_19] : memref<1x32xf32, #tpu.memory_space<vmem>>, vector<1x32xf32>
    %cst_20 = arith.constant dense<0.000000e+00> : vector<1x128xf32>
    %23 = tpu.matmul %22, %21, %cst_20 {dimension_numbers = #tpu.dot_dimension_numbers<[1], [0], [0], [1], [0, 0, 1, 1], [], []>} : vector<1x32xf32>, vector<32x128xf32>, vector<1x128xf32> -> vector<1x128xf32>
    %c0_21 = arith.constant 0 : index
    %c0_22 = arith.constant 0 : index
    %24 = memref.load %arg9[%c0_21, %c0_22] : memref<1x1xf32, #tpu.memory_space<smem>>
    %25 = vector.broadcast %24 : f32 to vector<1x128xf32>
    %26 = arith.addf %23, %25 : vector<1x128xf32>
    %c0_23 = arith.constant 0 : index
    %c0_24 = arith.constant 0 : index
    %27 = vector.load %arg10[%c0_23, %c0_24] : memref<1x128xf32, #tpu.memory_space<vmem>>, vector<1x128xf32>
    tpu.vector_store %arg10[%c0_23, %c0_24], %26 {strides = array<i32>} : memref<1x128xf32, #tpu.memory_space<vmem>>, vector<1x128xf32>,
    return
  }
  func.func @transform_0(%arg0: i32) -> (i32, i32) {
    %c0_i32 = arith.constant 0 : i32
    %c0_i32_0 = arith.constant 0 : i32
    return %c0_i32, %arg0 : i32, i32
  }
  func.func @transform_1(%arg0: i32) -> (i32, i32) {
    %c0_i32 = arith.constant 0 : i32
    %c0_i32_0 = arith.constant 0 : i32
    %c0_i32_1 = arith.constant 0 : i32
    return %c0_i32, %c0_i32_0 : i32, i32
  }
  func.func @transform_2(%arg0: i32) -> (i32, i32) {
    %c0_i32 = arith.constant 0 : i32
    %c0_i32_0 = arith.constant 0 : i32
    %c0_i32_1 = arith.constant 0 : i32
    return %c0_i32, %c0_i32_0 : i32, i32
  }
  func.func @transform_3(%arg0: i32) -> (i32, i32) {
    %c0_i32 = arith.constant 0 : i32
    %c0_i32_0 = arith.constant 0 : i32
    %c0_i32_1 = arith.constant 0 : i32
    return %c0_i32, %c0_i32_0 : i32, i32
  }
  func.func @transform_4(%arg0: i32) -> (i32, i32) {
    %c0_i32 = arith.constant 0 : i32
    %c0_i32_0 = arith.constant 0 : i32
    %c0_i32_1 = arith.constant 0 : i32
    return %c0_i32, %c0_i32_0 : i32, i32
  }
  func.func @transform_5(%arg0: i32) -> (i32, i32) {
    %c0_i32 = arith.constant 0 : i32
    %c0_i32_0 = arith.constant 0 : i32
    %c0_i32_1 = arith.constant 0 : i32
    return %c0_i32, %c0_i32_0 : i32, i32
  }
  func.func @transform_6(%arg0: i32) -> (i32, i32) {
    %c0_i32 = arith.constant 0 : i32
    %c0_i32_0 = arith.constant 0 : i32
    %c0_i32_1 = arith.constant 0 : i32
    return %c0_i32, %c0_i32_0 : i32, i32
  }
  func.func @transform_7(%arg0: i32) -> (i32, i32) {
    %c0_i32 = arith.constant 0 : i32
    %c0_i32_0 = arith.constant 0 : i32
    %c0_i32_1 = arith.constant 0 : i32
    return %c0_i32, %c0_i32_0 : i32, i32
  }
  func.func @transform_8(%arg0: i32) -> (i32, i32) {
    %c0_i32 = arith.constant 0 : i32
    %c0_i32_0 = arith.constant 0 : i32
    %c0_i32_1 = arith.constant 0 : i32
    return %c0_i32, %c0_i32_0 : i32, i32
  }
  func.func @transform_9(%arg0: i32) -> (i32, i32) {
    %c0_i32 = arith.constant 0 : i32
    %c0_i32_0 = arith.constant 0 : i32
    return %c0_i32, %arg0 : i32, i32
  }
}

</mosaic_0001>

<llo_original>
// kernel: tpu_custom_call.1
$region0: #{tpu_custom_call.1}
  #allocation0 [shape = 'u32[]', space=smem, size = 0x4, offset = 0x4, fixed_abs, tag = 'smem constant byte address 0x4 - core index']
  #allocation1 [shape = 'u32[144,128]{1,0:T(1,128)}', space=vmem, size = 0x12000, scoped, tag = 'internal scratch']
  #allocation2 [shape = 'f32[1,1]{1,0:T(1,128)S(6)}', space=smem, size = 0x200, scoped, tag = 'scoped memory for tpu_custom_call.1']
  %s0 = inlined_call_operand.vmem [shape: f32[24,8], index: 0, kind: input, shape index: {}]
  %s1 = inlined_call_operand.vmem [shape: f32[32,24], index: 1, kind: input, shape index: {}]
  %s2 = inlined_call_operand.vmem [shape: f32[32,1], index: 2, kind: input, shape index: {}]
  %s3 = inlined_call_operand.vmem [shape: f32[32,32], index: 3, kind: input, shape index: {}]
  %s4 = inlined_call_operand.vmem [shape: f32[32,1], index: 4, kind: input, shape index: {}]
  %s5 = inlined_call_operand.vmem [shape: f32[32,32], index: 5, kind: input, shape index: {}]
  %s6 = inlined_call_operand.vmem [shape: f32[32,1], index: 6, kind: input, shape index: {}]
  %s7 = inlined_call_operand.vmem [shape: f32[1,32], index: 7, kind: input, shape index: {}]
  %s8 = inlined_call_operand.<no memory space> [shape: f32[1,1], index: 8, kind: input, shape index: {}]
  %s9 = inlined_call_operand.hbm [shape: f32[1,8], index: 9, kind: output, shape index: {}]
  %s10 = sld [smem:[#allocation0]]
  $region46: #{tpu_custom_call.1} parent=0
    _
  %s12 = ssub.s32 1, %s10
  %s13 = scalar_select 0, %s12, %s10
  %14 = sst [smem:[#allocation2]] %s8
  $region1: #{tpu_custom_call.1} parent=0
    #allocation3 [shape = 'u8[512]{0}', space=vmem, size = 0x400, scoped, tag = 'output window, operand 0, single buffered']
    #allocation4 [shape = 's32[1]{0}', space=sflag, size = 0x4, scoped, tag = 'scoped memory for tpu_custom_call.1']
    %15 = vsyncpa [#allocation4], 0
    // Predicated region
    $region2: #{tpu_custom_call.1} parent=1 // pred_check
      _
    $region3: #{tpu_custom_call.1} parent=1 // pred_check_branch
      %17 = sbr.rel (0) target = $region5
    $region4: #{tpu_custom_call.1} parent=1 // pred_region
      _
    $region5: #{tpu_custom_call.1} parent=1 // pred_fallthru
      _
    // Predicated region
    $region6: #{tpu_custom_call.1} parent=1 // pred_check
      _
    $region7: #{tpu_custom_call.1} parent=1 // pred_check_branch
      %19 = sbr.rel (0) target = $region9
    $region8: #{tpu_custom_call.1} parent=1 // pred_region
      _
    $region9: #{tpu_custom_call.1} parent=1 // pred_fallthru
      _
    // Predicated region
    $region10: #{tpu_custom_call.1} parent=1 // pred_check
      _
    $region11: #{tpu_custom_call.1} parent=1 // pred_check_branch
      %21 = sbr.rel (0) target = $region13
    $region12: #{tpu_custom_call.1} parent=1 // pred_region
      _
    $region13: #{tpu_custom_call.1} parent=1 // pred_fallthru
      _
    // Predicated region
    $region14: #{tpu_custom_call.1} parent=1 // pred_check
      _
    $region15: #{tpu_custom_call.1} parent=1 // pred_check_branch
      %23 = sbr.rel (0) target = $region17
    $region16: #{tpu_custom_call.1} parent=1 // pred_region
      _
    $region17: #{tpu_custom_call.1} parent=1 // pred_fallthru
      _
    // Predicated region
    $region18: #{tpu_custom_call.1} parent=1 // pred_check
      _
    $region19: #{tpu_custom_call.1} parent=1 // pred_check_branch
      %25 = sbr.rel (0) target = $region21
    $region20: #{tpu_custom_call.1} parent=1 // pred_region
      _
    $region21: #{tpu_custom_call.1} parent=1 // pred_fallthru
      _
    // Predicated region
    $region22: #{tpu_custom_call.1} parent=1 // pred_check
      _
    $region23: #{tpu_custom_call.1} parent=1 // pred_check_branch
      %27 = sbr.rel (0) target = $region25
    $region24: #{tpu_custom_call.1} parent=1 // pred_region
      _
    $region25: #{tpu_custom_call.1} parent=1 // pred_fallthru
      _
    // Predicated region
    $region26: #{tpu_custom_call.1} parent=1 // pred_check
      _
    $region27: #{tpu_custom_call.1} parent=1 // pred_check_branch
      %29 = sbr.rel (0) target = $region29
    $region28: #{tpu_custom_call.1} parent=1 // pred_region
      _
    $region29: #{tpu_custom_call.1} parent=1 // pred_fallthru
      _
    // Predicated region
    $region30: #{tpu_custom_call.1} parent=1 // pred_check
      _
    $region31: #{tpu_custom_call.1} parent=1 // pred_check_branch
      %31 = sbr.rel (0) target = $region33
    $region32: #{tpu_custom_call.1} parent=1 // pred_region
      _
    $region33: #{tpu_custom_call.1} parent=1 // pred_fallthru
      _
    // Predicated region
    $region34: #{tpu_custom_call.1} parent=1 // pred_check
      _
    $region35: #{tpu_custom_call.1} parent=1 // pred_check_branch
      %33 = sbr.rel (0) target = $region37
    $region36: #{tpu_custom_call.1} parent=1 // pred_region
      _
    $region37: #{tpu_custom_call.1} parent=1 // pred_fallthru
      _
    %v34 = vld [vmem:[%s1] sm:$0xff]
    %v35 = vld [vmem:[%s1 + $0x8] sm:$0xff]
    %v36 = vld [vmem:[%s1 + $0x10] sm:$0xff]
    %v37 = vld [vmem:[%s1 + $0x18] sm:$0xff]
    %v38 = vld [vmem:[%s0] sm:$0xff]
    %v39 = vld [vmem:[%s0 + $0x8] sm:$0xff]
    %v40 = vld [vmem:[%s0 + $0x10] sm:$0xff]
    %v41 = vld [vmem:[%s2] sm:$0xff]
    %v42 = vld [vmem:[%s2 + $0x8] sm:$0xff]
    %v43 = vld [vmem:[%s2 + $0x10] sm:$0xff]
    %v44 = vld [vmem:[%s2 + $0x18] sm:$0xff]
    %46 = vset.pattern.permute.xlu0 0
    %47 = vperm.xlu0 %46, %v41
    %v48 = vpop.permute.xlu0 %47
    %51 = vset.pattern.permute.xlu0 0
    %52 = vperm.xlu0 %51, %v42
    %v53 = vpop.permute.xlu0 %52
    %56 = vset.pattern.permute.xlu0 0
    %57 = vperm.xlu0 %56, %v43
    %v58 = vpop.permute.xlu0 %57
    %61 = vset.pattern.permute.xlu0 0
    %62 = vperm.xlu0 %61, %v44
    %v63 = vpop.permute.xlu0 %62
    %vm65 = vcmask 195584
    %v67 = vsel %vm65, %v34, 0
    %v70 = vsel %vm65, %v35, 0
    %v73 = vsel %vm65, %v36, 0
    %v76 = vsel %vm65, %v37, 0
    %78 = vmatprep.subr.mxu0 0.0
    %79 = vmatpush1.msra.mxu0 %v38
    %80 = vmatprep.subr.mxu0 0.0
    %81 = vmatpush1.msra.mxu0 %v39
    %82 = vmatprep.subr.mxu0 0.0
    %83 = vmatpush1.msra.mxu0 %v40
    %84 = vmatprep.subr.mxu0 0.0
    %85 = vmatpush1.msra.mxu0 0.0
    %86 = vmatprep.subr.mxu0 0.0
    %87 = vmatpush1.msra.mxu0 0.0
    %88 = vmatprep.subr.mxu0 0.0
    %89 = vmatpush1.msra.mxu0 0.0
    %90 = vmatprep.subr.mxu0 0.0
    %91 = vmatpush1.msra.mxu0 0.0
    %92 = vmatprep.subr.mxu0 0.0
    %93 = vmatpush1.msra.mxu0 0.0
    %94 = vmatprep.subr.mxu0 0.0
    %95 = vmatpush1.msra.mxu0 0.0
    %96 = vmatprep.subr.mxu0 0.0
    %97 = vmatpush1.msra.mxu0 0.0
    %98 = vmatprep.subr.mxu0 0.0
    %99 = vmatpush1.msra.mxu0 0.0
    %100 = vmatprep.subr.mxu0 0.0
    %101 = vmatpush1.msra.mxu0 0.0
    %102 = vmatprep.subr.mxu0 0.0
    %103 = vmatpush1.msra.mxu0 0.0
    %104 = vmatprep.subr.mxu0 0.0
    %105 = vmatpush1.msra.mxu0 0.0
    %106 = vmatprep.subr.mxu0 0.0
    %107 = vmatpush1.msra.mxu0 0.0
    %108 = vmatprep.subr.mxu0 0.0
    %109 = vmatpush1.msra.mxu0 0.0
    %110 = vmatprep.subr.mxu0 0.0
    %111 = vmatpush1.msra.mxu0 0.0
    %112 = vmatprep.subr.mxu0 0.0
    %113 = vmatpush1.msra.mxu0 0.0
    %114 = vmatprep.subr.mxu0 0.0
    %115 = vmatpush1.msra.mxu0 0.0
    %116 = vmatprep.subr.mxu0 0.0
    %117 = vmatpush1.msra.mxu0 0.0
    %118 = vmatprep.subr.mxu0 0.0
    %119 = vmatpush1.msra.mxu0 0.0
    %120 = vmatprep.subr.mxu0 0.0
    %121 = vmatpush1.msra.mxu0 0.0
    %122 = vmatprep.subr.mxu0 0.0
    %123 = vmatpush1.msra.mxu0 0.0
    %124 = vmatprep.subr.mxu0 0.0
    %125 = vmatpush1.msra.mxu0 0.0
    %126 = vmatprep.subr.mxu0 0.0
    %127 = vmatpush1.msra.mxu0 0.0
    %128 = vmatprep.subr.mxu0 0.0
    %129 = vmatpush1.msra.mxu0 0.0
    %130 = vmatprep.subr.mxu0 0.0
    %131 = vmatpush1.msra.mxu0 0.0
    %132 = vmatprep.subr.mxu0 0.0
    %133 = vmatpush1.msra.mxu0 0.0
    %134 = vmatprep.subr.mxu0 0.0
    %135 = vmatpush1.msra.mxu0 0.0
    %136 = vmatprep.subr.mxu0 0.0
    %137 = vmatpush1.msra.mxu0 0.0
    %138 = vmatprep.subr.mxu0 0.0
    %139 = vmatpush1.msra.mxu0 0.0
    %140 = vmatprep.subr.mxu0 0.0
    %141 = vmatpush1.msra.mxu0 0.0
    %142 = vmatprep.mubr.f32.mxu0 0.0
    %143 = vmatmul.mubr.f32.gmra.mrb[0].mxu0 %v67
    %v144 = vpop.f32.mrb[0].mxu0
    %v145 = vadd.f32 %v48, %v144
    %v146 = vpop.f32.mrb[0].mxu0
    %147 = vmatprep.mubr.f32.mxu0 0.0
    %148 = vmatmul.mubr.f32.gmra.mrb[0].mxu0 %v70
    %v149 = vpop.f32.mrb[0].mxu0
    %v150 = vadd.f32 %v53, %v149
    %v151 = vpop.f32.mrb[0].mxu0
    %152 = vmatprep.mubr.f32.mxu0 0.0
    %153 = vmatmul.mubr.f32.gmra.mrb[0].mxu0 %v73
    %v154 = vpop.f32.mrb[0].mxu0
    %v155 = vadd.f32 %v58, %v154
    %v156 = vpop.f32.mrb[0].mxu0
    %157 = vmatprep.mubr.f32.mxu0 0.0
    %158 = vmatmul.mubr.f32.gmra.mrb[0].mxu0 %v76
    %v159 = vpop.f32.mrb[0].mxu0
    %v160 = vadd.f32 %v63, %v159
    %v161 = vpop.f32.mrb[0].mxu0
    %162 = vdwg.mxu0
    %v163 = vmax.f32 %v145, 0.0
    %v164 = vmax.f32 %v150, 0.0
    %v165 = vmax.f32 %v155, 0.0
    %v166 = vmax.f32 %v160, 0.0
    %v167 = vld [vmem:[%s3] sm:$0xff]
    %v168 = vld [vmem:[%s3 + $0x8] sm:$0xff]
    %v169 = vld [vmem:[%s3 + $0x10] sm:$0xff]
    %v170 = vld [vmem:[%s3 + $0x18] sm:$0xff]
    %v171 = vld [vmem:[%s4] sm:$0xff]
    %v172 = vld [vmem:[%s4 + $0x8] sm:$0xff]
    %v173 = vld [vmem:[%s4 + $0x10] sm:$0xff]
    %v174 = vld [vmem:[%s4 + $0x18] sm:$0xff]
    %176 = vset.pattern.permute.xlu0 0
    %177 = vperm.xlu0 %176, %v171
    %v178 = vpop.permute.xlu0 %177
    %181 = vset.pattern.permute.xlu0 0
    %182 = vperm.xlu0 %181, %v172
    %v183 = vpop.permute.xlu0 %182
    %186 = vset.pattern.permute.xlu0 0
    %187 = vperm.xlu0 %186, %v173
    %v188 = vpop.permute.xlu0 %187
    %191 = vset.pattern.permute.xlu0 0
    %192 = vperm.xlu0 %191, %v174
    %v193 = vpop.permute.xlu0 %192
    %vm195 = vcmask 261120
    %v197 = vsel %vm195, %v167, 0
    %v200 = vsel %vm195, %v168, 0
    %v203 = vsel %vm195, %v169, 0
    %v206 = vsel %vm195, %v170, 0
    %208 = vmatprep.subr.mxu0 0.0
    %209 = vmatpush1.msra.mxu0 %v163
    %210 = vmatprep.subr.mxu0 0.0
    %211 = vmatpush1.msra.mxu0 %v164
    %212 = vmatprep.subr.mxu0 0.0
    %213 = vmatpush1.msra.mxu0 %v165
    %214 = vmatprep.subr.mxu0 0.0
    %215 = vmatpush1.msra.mxu0 %v166
    %216 = vmatprep.subr.mxu0 0.0
    %217 = vmatpush1.msra.mxu0 0.0
    %218 = vmatprep.subr.mxu0 0.0
    %219 = vmatpush1.msra.mxu0 0.0
    %220 = vmatprep.subr.mxu0 0.0
    %221 = vmatpush1.msra.mxu0 0.0
    %222 = vmatprep.subr.mxu0 0.0
    %223 = vmatpush1.msra.mxu0 0.0
    %224 = vmatprep.subr.mxu0 0.0
    %225 = vmatpush1.msra.mxu0 0.0
    %226 = vmatprep.subr.mxu0 0.0
    %227 = vmatpush1.msra.mxu0 0.0
    %228 = vmatprep.subr.mxu0 0.0
    %229 = vmatpush1.msra.mxu0 0.0
    %230 = vmatprep.subr.mxu0 0.0
    %231 = vmatpush1.msra.mxu0 0.0
    %232 = vmatprep.subr.mxu0 0.0
    %233 = vmatpush1.msra.mxu0 0.0
    %234 = vmatprep.subr.mxu0 0.0
    %235 = vmatpush1.msra.mxu0 0.0
    %236 = vmatprep.subr.mxu0 0.0
    %237 = vmatpush1.msra.mxu0 0.0
    %238 = vmatprep.subr.mxu0 0.0
    %239 = vmatpush1.msra.mxu0 0.0
    %240 = vmatprep.subr.mxu0 0.0
    %241 = vmatpush1.msra.mxu0 0.0
    %242 = vmatprep.subr.mxu0 0.0
    %243 = vmatpush1.msra.mxu0 0.0
    %244 = vmatprep.subr.mxu0 0.0
    %245 = vmatpush1.msra.mxu0 0.0
    %246 = vmatprep.subr.mxu0 0.0
    %247 = vmatpush1.msra.mxu0 0.0
    %248 = vmatprep.subr.mxu0 0.0
    %249 = vmatpush1.msra.mxu0 0.0
    %250 = vmatprep.subr.mxu0 0.0
    %251 = vmatpush1.msra.mxu0 0.0
    %252 = vmatprep.subr.mxu0 0.0
    %253 = vmatpush1.msra.mxu0 0.0
    %254 = vmatprep.subr.mxu0 0.0
    %255 = vmatpush1.msra.mxu0 0.0
    %256 = vmatprep.subr.mxu0 0.0
    %257 = vmatpush1.msra.mxu0 0.0
    %258 = vmatprep.subr.mxu0 0.0
    %259 = vmatpush1.msra.mxu0 0.0
    %260 = vmatprep.subr.mxu0 0.0
    %261 = vmatpush1.msra.mxu0 0.0
    %262 = vmatprep.subr.mxu0 0.0
    %263 = vmatpush1.msra.mxu0 0.0
    %264 = vmatprep.subr.mxu0 0.0
    %265 = vmatpush1.msra.mxu0 0.0
    %266 = vmatprep.subr.mxu0 0.0
    %267 = vmatpush1.msra.mxu0 0.0
    %268 = vmatprep.subr.mxu0 0.0
    %269 = vmatpush1.msra.mxu0 0.0
    %270 = vmatprep.subr.mxu0 0.0
    %271 = vmatpush1.msra.mxu0 0.0
    %272 = vmatprep.mubr.f32.mxu0 0.0
    %273 = vmatmul.mubr.f32.gmra.mrb[0].mxu0 %v197
    %v274 = vpop.f32.mrb[0].mxu0
    %v275 = vadd.f32 %v178, %v274
    %v276 = vpop.f32.mrb[0].mxu0
    %277 = vmatprep.mubr.f32.mxu0 0.0
    %278 = vmatmul.mubr.f32.gmra.mrb[0].mxu0 %v200
    %v279 = vpop.f32.mrb[0].mxu0
    %v280 = vadd.f32 %v183, %v279
    %v281 = vpop.f32.mrb[0].mxu0
    %282 = vmatprep.mubr.f32.mxu0 0.0
    %283 = vmatmul.mubr.f32.gmra.mrb[0].mxu0 %v203
    %v284 = vpop.f32.mrb[0].mxu0
    %v285 = vadd.f32 %v188, %v284
    %v286 = vpop.f32.mrb[0].mxu0
    %287 = vmatprep.mubr.f32.mxu0 0.0
    %288 = vmatmul.mubr.f32.gmra.mrb[0].mxu0 %v206
    %v289 = vpop.f32.mrb[0].mxu0
    %v290 = vadd.f32 %v193, %v289
    %v291 = vpop.f32.mrb[0].mxu0
    %292 = vdwg.mxu0
    %v293 = vmax.f32 %v275, 0.0
    %v294 = vmax.f32 %v280, 0.0
    %v295 = vmax.f32 %v285, 0.0
    %v296 = vmax.f32 %v290, 0.0
    %v297 = vld [vmem:[%s5] sm:$0xff]
    %v298 = vld [vmem:[%s5 + $0x8] sm:$0xff]
    %v299 = vld [vmem:[%s5 + $0x10] sm:$0xff]
    %v300 = vld [vmem:[%s5 + $0x18] sm:$0xff]
    %v301 = vld [vmem:[%s6] sm:$0xff]
    %v302 = vld [vmem:[%s6 + $0x8] sm:$0xff]
    %v303 = vld [vmem:[%s6 + $0x10] sm:$0xff]
    %v304 = vld [vmem:[%s6 + $0x18] sm:$0xff]
    %306 = vset.pattern.permute.xlu0 0
    %307 = vperm.xlu0 %306, %v301
    %v308 = vpop.permute.xlu0 %307
    %311 = vset.pattern.permute.xlu0 0
    %312 = vperm.xlu0 %311, %v302
    %v313 = vpop.permute.xlu0 %312
    %316 = vset.pattern.permute.xlu0 0
    %317 = vperm.xlu0 %316, %v303
    %v318 = vpop.permute.xlu0 %317
    %321 = vset.pattern.permute.xlu0 0
    %322 = vperm.xlu0 %321, %v304
    %v323 = vpop.permute.xlu0 %322
    %v326 = vsel %vm195, %v297, 0
    %v329 = vsel %vm195, %v298, 0
    %v332 = vsel %vm195, %v299, 0
    %v335 = vsel %vm195, %v300, 0
    %337 = vmatprep.subr.mxu0 0.0
    %338 = vmatpush1.msra.mxu0 %v293
    %339 = vmatprep.subr.mxu0 0.0
    %340 = vmatpush1.msra.mxu0 %v294
    %341 = vmatprep.subr.mxu0 0.0
    %342 = vmatpush1.msra.mxu0 %v295
    %343 = vmatprep.subr.mxu0 0.0
    %344 = vmatpush1.msra.mxu0 %v296
    %345 = vmatprep.subr.mxu0 0.0
    %346 = vmatpush1.msra.mxu0 0.0
    %347 = vmatprep.subr.mxu0 0.0
    %348 = vmatpush1.msra.mxu0 0.0
    %349 = vmatprep.subr.mxu0 0.0
    %350 = vmatpush1.msra.mxu0 0.0
    %351 = vmatprep.subr.mxu0 0.0
    %352 = vmatpush1.msra.mxu0 0.0
    %353 = vmatprep.subr.mxu0 0.0
    %354 = vmatpush1.msra.mxu0 0.0
    %355 = vmatprep.subr.mxu0 0.0
    %356 = vmatpush1.msra.mxu0 0.0
    %357 = vmatprep.subr.mxu0 0.0
    %358 = vmatpush1.msra.mxu0 0.0
    %359 = vmatprep.subr.mxu0 0.0
    %360 = vmatpush1.msra.mxu0 0.0
    %361 = vmatprep.subr.mxu0 0.0
    %362 = vmatpush1.msra.mxu0 0.0
    %363 = vmatprep.subr.mxu0 0.0
    %364 = vmatpush1.msra.mxu0 0.0
    %365 = vmatprep.subr.mxu0 0.0
    %366 = vmatpush1.msra.mxu0 0.0
    %367 = vmatprep.subr.mxu0 0.0
    %368 = vmatpush1.msra.mxu0 0.0
    %369 = vmatprep.subr.mxu0 0.0
    %370 = vmatpush1.msra.mxu0 0.0
    %371 = vmatprep.subr.mxu0 0.0
    %372 = vmatpush1.msra.mxu0 0.0
    %373 = vmatprep.subr.mxu0 0.0
    %374 = vmatpush1.msra.mxu0 0.0
    %375 = vmatprep.subr.mxu0 0.0
    %376 = vmatpush1.msra.mxu0 0.0
    %377 = vmatprep.subr.mxu0 0.0
    %378 = vmatpush1.msra.mxu0 0.0
    %379 = vmatprep.subr.mxu0 0.0
    %380 = vmatpush1.msra.mxu0 0.0
    %381 = vmatprep.subr.mxu0 0.0
    %382 = vmatpush1.msra.mxu0 0.0
    %383 = vmatprep.subr.mxu0 0.0
    %384 = vmatpush1.msra.mxu0 0.0
    %385 = vmatprep.subr.mxu0 0.0
    %386 = vmatpush1.msra.mxu0 0.0
    %387 = vmatprep.subr.mxu0 0.0
    %388 = vmatpush1.msra.mxu0 0.0
    %389 = vmatprep.subr.mxu0 0.0
    %390 = vmatpush1.msra.mxu0 0.0
    %391 = vmatprep.subr.mxu0 0.0
    %392 = vmatpush1.msra.mxu0 0.0
    %393 = vmatprep.subr.mxu0 0.0
    %394 = vmatpush1.msra.mxu0 0.0
    %395 = vmatprep.subr.mxu0 0.0
    %396 = vmatpush1.msra.mxu0 0.0
    %397 = vmatprep.subr.mxu0 0.0
    %398 = vmatpush1.msra.mxu0 0.0
    %399 = vmatprep.subr.mxu0 0.0
    %400 = vmatpush1.msra.mxu0 0.0
    %401 = vmatprep.mubr.f32.mxu0 0.0
    %402 = vmatmul.mubr.f32.gmra.mrb[0].mxu0 %v326
    %v403 = vpop.f32.mrb[0].mxu0
    %v404 = vadd.f32 %v308, %v403
    %v405 = vpop.f32.mrb[0].mxu0
    %406 = vmatprep.mubr.f32.mxu0 0.0
    %407 = vmatmul.mubr.f32.gmra.mrb[0].mxu0 %v329
    %v408 = vpop.f32.mrb[0].mxu0
    %v409 = vadd.f32 %v313, %v408
    %v410 = vpop.f32.mrb[0].mxu0
    %411 = vmatprep.mubr.f32.mxu0 0.0
    %412 = vmatmul.mubr.f32.gmra.mrb[0].mxu0 %v332
    %v413 = vpop.f32.mrb[0].mxu0
    %v414 = vadd.f32 %v318, %v413
    %v415 = vpop.f32.mrb[0].mxu0
    %416 = vmatprep.mubr.f32.mxu0 0.0
    %417 = vmatmul.mubr.f32.gmra.mrb[0].mxu0 %v335
    %v418 = vpop.f32.mrb[0].mxu0
    %v419 = vadd.f32 %v323, %v418
    %v420 = vpop.f32.mrb[0].mxu0
    %421 = vdwg.mxu0
    %v422 = vmax.f32 %v404, 0.0
    %v423 = vmax.f32 %v409, 0.0
    %v424 = vmax.f32 %v414, 0.0
    %v425 = vmax.f32 %v419, 0.0
    %v426 = vld [vmem:[%s7] sm:$0x1]
    %s427 = sld [smem:[#allocation2]]
    %v428 = vstv %s427
    %v430 = vsel %vm195, %v426, 0
    %432 = vmatprep.subr.mxu0 0.0
    %433 = vmatpush1.msra.mxu0 %v422
    %434 = vmatprep.subr.mxu0 0.0
    %435 = vmatpush1.msra.mxu0 %v423
    %436 = vmatprep.subr.mxu0 0.0
    %437 = vmatpush1.msra.mxu0 %v424
    %438 = vmatprep.subr.mxu0 0.0
    %439 = vmatpush1.msra.mxu0 %v425
    %440 = vmatprep.subr.mxu0 0.0
    %441 = vmatpush1.msra.mxu0 0.0
    %442 = vmatprep.subr.mxu0 0.0
    %443 = vmatpush1.msra.mxu0 0.0
    %444 = vmatprep.subr.mxu0 0.0
    %445 = vmatpush1.msra.mxu0 0.0
    %446 = vmatprep.subr.mxu0 0.0
    %447 = vmatpush1.msra.mxu0 0.0
    %448 = vmatprep.subr.mxu0 0.0
    %449 = vmatpush1.msra.mxu0 0.0
    %450 = vmatprep.subr.mxu0 0.0
    %451 = vmatpush1.msra.mxu0 0.0
    %452 = vmatprep.subr.mxu0 0.0
    %453 = vmatpush1.msra.mxu0 0.0
    %454 = vmatprep.subr.mxu0 0.0
    %455 = vmatpush1.msra.mxu0 0.0
    %456 = vmatprep.subr.mxu0 0.0
    %457 = vmatpush1.msra.mxu0 0.0
    %458 = vmatprep.subr.mxu0 0.0
    %459 = vmatpush1.msra.mxu0 0.0
    %460 = vmatprep.subr.mxu0 0.0
    %461 = vmatpush1.msra.mxu0 0.0
    %462 = vmatprep.subr.mxu0 0.0
    %463 = vmatpush1.msra.mxu0 0.0
    %464 = vmatprep.subr.mxu0 0.0
    %465 = vmatpush1.msra.mxu0 0.0
    %466 = vmatprep.subr.mxu0 0.0
    %467 = vmatpush1.msra.mxu0 0.0
    %468 = vmatprep.subr.mxu0 0.0
    %469 = vmatpush1.msra.mxu0 0.0
    %470 = vmatprep.subr.mxu0 0.0
    %471 = vmatpush1.msra.mxu0 0.0
    %472 = vmatprep.subr.mxu0 0.0
    %473 = vmatpush1.msra.mxu0 0.0
    %474 = vmatprep.subr.mxu0 0.0
    %475 = vmatpush1.msra.mxu0 0.0
    %476 = vmatprep.subr.mxu0 0.0
    %477 = vmatpush1.msra.mxu0 0.0
    %478 = vmatprep.subr.mxu0 0.0
    %479 = vmatpush1.msra.mxu0 0.0
    %480 = vmatprep.subr.mxu0 0.0
    %481 = vmatpush1.msra.mxu0 0.0
    %482 = vmatprep.subr.mxu0 0.0
    %483 = vmatpush1.msra.mxu0 0.0
    %484 = vmatprep.subr.mxu0 0.0
    %485 = vmatpush1.msra.mxu0 0.0
    %486 = vmatprep.subr.mxu0 0.0
    %487 = vmatpush1.msra.mxu0 0.0
    %488 = vmatprep.subr.mxu0 0.0
    %489 = vmatpush1.msra.mxu0 0.0
    %490 = vmatprep.subr.mxu0 0.0
    %491 = vmatpush1.msra.mxu0 0.0
    %492 = vmatprep.subr.mxu0 0.0
    %493 = vmatpush1.msra.mxu0 0.0
    %494 = vmatprep.subr.mxu0 0.0
    %495 = vmatpush1.msra.mxu0 0.0
    %496 = vmatprep.mubr.f32.mxu0 0.0
    %497 = vmatmul.mubr.f32.gmra.mrb[0].mxu0 %v430
    %v498 = vpop.f32.mrb[0].mxu0
    %v499 = vadd.f32 %v428, %v498
    %v500 = vpop.f32.mrb[0].mxu0
    %501 = vdwg.mxu0
    %502 = vst [vmem:[#allocation3] sm:$0x1] %v499
    // Predicated region
    $region38: #{tpu_custom_call.1} parent=1 // pred_check
      _
    $region39: #{tpu_custom_call.1} parent=1 // pred_check_branch
      %504 = sbr.rel (0) target = $region41
    $region40: #{tpu_custom_call.1} parent=1 // pred_region
      %s506 = ssub.s32 16, 16
      %507 = vsyncadd [#allocation4], %s506
      %s509 = sshll.u32 [#allocation3], 4
      %s510 = int_to_ptr.vmem [resolvable:$true] %s509
      %512 = dma.vmem_to_hbm [thread:$0]  %s510, 16, %s9, [#allocation4]
    $region41: #{tpu_custom_call.1} parent=1 // pred_fallthru
      _
    // Predicated region
    $region42: #{tpu_custom_call.1} parent=1 // pred_check
      _
    $region43: #{tpu_custom_call.1} parent=1 // pred_check_branch
      %514 = sbr.rel (0) target = $region45
    $region44: #{tpu_custom_call.1} parent=1 // pred_region
      %515 = dma.done [#allocation4], 16
    $region45: #{tpu_custom_call.1} parent=1 // pred_fallthru
      _
    %516 = vsyncpa [#allocation4], 1

</llo_original>
